<compile_context>
chip_gen: v7x
topology: tpu7x:2x2x1
jax: 0.10.0
libtpu: 0.0.40
codegen_flags: <defaults>
</compile_context>

<pallas_src>
import functools

import jax
import jax.numpy as jnp
from jax.experimental import pallas as pl
from jax.experimental.pallas import tpu as pltpu

LANES = 128


def _monotone_linear_kernel(w_ref, b_ref, x_ref, o_ref):
    # w_ref, b_ref: SMEM (1,) f32 scalars.  x_ref, o_ref: VMEM (tr, tc) tiles.
    w = jnp.abs(w_ref[0])
    b = b_ref[0]
    # f32 scalars promote the expression; cast back so the store matches o_ref.
    o_ref[...] = (w * x_ref[...] + b).astype(o_ref.dtype)


@functools.lru_cache(maxsize=1)
def _tpu_config():
    """Generation-aware config: block size, VMEM limit, min grid, row semantics."""
    kind = ""
    try:  # Preferred: structured hardware query.
        info = pltpu.get_tpu_info()
        for attr in ("chip_version", "version", "chip_name", "name"):
            if hasattr(info, attr):
                kind += " " + str(getattr(info, attr))
        kind += " " + str(info)
    except Exception:
        pass
    try:  # Fallback: device_kind string.
        kind += " " + jax.devices()[0].device_kind
    except Exception:
        pass
    kind = kind.lower()

    if "v7" in kind or "7x" in kind:
        # v7x: 2 TCs/chip, 64 MiB VMEM/TC, ~3.2 TB/s. Bigger blocks hide the
        # ~0.35us/step overhead; explicit VMEM limit leaves headroom for
        # 2x(in)+2x(out) 6 MiB buffers (24 MiB) plus Mosaic scratch.
        row_sem = getattr(pltpu, "CORE_PARALLEL", "parallel")
        return {"target_bytes": 6 << 20, "vmem_limit": 48 << 20,
                "min_grid": 2, "row_sem": row_sem}
    if "v6" in kind:
        # v6e: 4 MiB blocks; 4 double-buffers = 16 MiB fits the 32 MiB default
        # scoped VMEM without any flag.
        return {"target_bytes": 4 << 20, "vmem_limit": None,
                "min_grid": 1, "row_sem": "parallel"}
    # v5e (16 MiB default scoped VMEM) and unknown generations: conservative.
    return {"target_bytes": 2 << 20, "vmem_limit": None,
            "min_grid": 1, "row_sem": "parallel"}


def _plan_tiles(rows, cols, itemsize, cfg):
    """Pick (tile_rows, tile_cols, grid) for a 2D slab [rows, cols].

    Blocks always satisfy the TPU constraint: tile_rows is a multiple of the
    dtype sublane count (or equals rows); tile_cols is a multiple of 128 (or
    equals cols). Partial boundary blocks are left to Pallas, so no wrapper
    padding is ever needed.
    """
    sublane = max(8, 32 // itemsize)           # 8 f32 / 16 bf16 / 32 int8
    target = cfg["target_bytes"]

    # Column tile: full width unless a single sublane-group of rows would blow
    # the target (huge ragged last dim), in which case tile at a 128-multiple.
    cols_vmem = pl.cdiv(cols, LANES) * LANES   # lane padding inside VMEM
    if cols <= LANES or sublane * cols_vmem * itemsize <= target:
        tc = cols
    else:
        tc = max(LANES, (target // (sublane * itemsize)) // LANES * LANES)

    # Row tile: as many sublane-multiples as fit in the target block.
    block_row_bytes = pl.cdiv(tc, LANES) * LANES * itemsize
    tr = max(sublane, (target // block_row_bytes) // sublane * sublane)
    if rows <= tr:
        tr = rows                              # single row-block (== full dim)
    grid_r = pl.cdiv(rows, tr)
    grid_c = pl.cdiv(cols, tc)

    # v7x: never leave a TensorCore idle — split the row axis into >= 2 blocks
    # whenever it is splittable.
    if cfg["min_grid"] > 1 and grid_r * grid_c < cfg["min_grid"] and rows > sublane:
        tr = max(sublane, pl.cdiv(pl.cdiv(rows, cfg["min_grid"]), sublane) * sublane)
        grid_r = pl.cdiv(rows, tr)

    return tr, tc, (grid_r, grid_c)


def monotone_linear(x, weight, bias, *, donate_x=False):
    """y = |weight| * x + bias, elementwise, via a Pallas TPU kernel.

    x: arbitrary-shape float array. weight, bias: (1,)-shaped parameters.
    Output dtype follows x.dtype.
    """
    orig_shape = x.shape
    orig_dtype = x.dtype
    total = x.size
    if total == 0:
        return x                                # nothing to compute

    # SMEM scalars are 32-bit: force the params to f32 (1,).
    w = jnp.asarray(weight, dtype=jnp.float32).reshape((1,))
    b = jnp.asarray(bias, dtype=jnp.float32).reshape((1,))

    # 2D view (contiguous reshape => free). No pad, no output slice, ever.
    if total % LANES == 0:
        rows, cols = total // LANES, LANES      # maximal lane density
    elif x.ndim >= 1:
        cols = orig_shape[-1]
        rows = total // cols
    else:
        rows, cols = 1, 1
    x2d = x.reshape(rows, cols)

    cfg = _tpu_config()
    itemsize = jnp.dtype(orig_dtype).itemsize
    tr, tc, grid = _plan_tiles(rows, cols, itemsize, cfg)

    row_sem = cfg["row_sem"]
    col_sem = "arbitrary" if isinstance(row_sem, str) else getattr(
        pltpu, "ARBITRARY", "arbitrary")
    cp_kwargs = {"dimension_semantics": (row_sem, col_sem)}
    if cfg["vmem_limit"] is not None:
        cp_kwargs["vmem_limit_bytes"] = cfg["vmem_limit"]

    call_kwargs = {}
    if donate_x:
        # x2d is input index 2; lets XLA reuse its HBM buffer for the output
        # (halves peak HBM footprint; traffic is unchanged).
        call_kwargs["input_output_aliases"] = {2: 0}

    # NOTE: pipeline_mode=pl.Buffered(3) on the x/out BlockSpecs is a possible
    # further sweep if a trace shows DMA issue gaps; depth-2 is kept here.
    out2d = pl.pallas_call(
        _monotone_linear_kernel,
        out_shape=jax.ShapeDtypeStruct((rows, cols), orig_dtype),
        grid_spec=pltpu.PrefetchScalarGridSpec(
            num_scalar_prefetch=0,
            grid=grid,
            in_specs=[
                pl.BlockSpec(memory_space=pltpu.SMEM),             # weight (1,)
                pl.BlockSpec(memory_space=pltpu.SMEM),             # bias   (1,)
                pl.BlockSpec((tr, tc), lambda i, j: (i, j)),
            ],
            out_specs=pl.BlockSpec((tr, tc), lambda i, j: (i, j)),
        ),
        compiler_params=pltpu.CompilerParams(**cp_kwargs),
        **call_kwargs,
    )(w, b, x2d)

    return out2d.reshape(orig_shape)            # contiguous reshape (free)


if __name__ == "__main__":
    key = jax.random.PRNGKey(0)
    kx, kw, kb = jax.random.split(key, 3)

    # Deterministic scalar parameters (PyTorch init uses zeros; use nonzero
    # values so the abs() path is actually exercised).
    weight = jax.random.normal(kw, (1,), dtype=jnp.float32)
    bias = jax.random.normal(kb, (1,), dtype=jnp.float32)

    # 1) aligned f32 input — flat lane-dense [rows,128] path, no padding.
    x = jax.random.normal(kx, (2, 4, 16, 16), dtype=jnp.float32)
    y = jax.block_until_ready(monotone_linear(x, weight, bias))
    y_ref = jnp.abs(weight[0]) * x + bias[0]
    assert y.shape == x.shape and y.dtype == x.dtype
    assert jnp.allclose(y, y_ref, atol=1e-6, rtol=1e-6), "f32 aligned mismatch"

    # 2) ragged-size f32 input — 2D-view path: no pad, no output slice.
    x2 = jax.random.normal(kx, (3, 5, 7), dtype=jnp.float32)
    y2 = jax.block_until_ready(monotone_linear(x2, weight, bias))
    y2_ref = jnp.abs(weight[0]) * x2 + bias[0]
    assert y2.shape == x2.shape and y2.dtype == x2.dtype
    assert jnp.allclose(y2, y2_ref, atol=1e-6, rtol=1e-6), "f32 ragged mismatch"

    # 3) bf16 input — dtype-aware sublane tiling + explicit output cast.
    x3 = jax.random.normal(kx, (2, 4, 16, 16), dtype=jnp.float32).astype(jnp.bfloat16)
    y3 = jax.block_until_ready(monotone_linear(x3, weight, bias))
    y3_ref = (jnp.abs(weight[0]) * x3 + bias[0]).astype(jnp.bfloat16)
    assert y3.shape == x3.shape and y3.dtype == jnp.bfloat16
    assert jnp.allclose(y3.astype(jnp.float32), y3_ref.astype(jnp.float32),
                        atol=1e-2, rtol=1e-2), "bf16 mismatch"

    print("KERNEL_OK")
</pallas_src>

<mosaic_0001>
module attributes {stable_mosaic.version = 11 : i64} {
  func.func @_monotone_linear_kernel(%arg0: i32, %arg1: i32, %arg2: memref<1xf32, #tpu.memory_space<smem>>, %arg3: memref<1xf32, #tpu.memory_space<smem>>, %arg4: memref<16x128xf32, #tpu.memory_space<vmem>>, %arg5: memref<16x128xf32, #tpu.memory_space<vmem>>) attributes {dimension_semantics = [#tpu.dimension_semantics<parallel>, #tpu.dimension_semantics<arbitrary>], iteration_bounds = array<i64: 1, 1>, scalar_prefetch = 0 : i64, scratch_operands = 0 : i64, tpu.core_type = #tpu.core_type<tc>, window_params = [{transform_indices = @transform_0, window_bounds = array<i64: 1>}, {transform_indices = @transform_1, window_bounds = array<i64: 1>}, {transform_indices = @transform_2, window_bounds = array<i64: 16, 128>}, {transform_indices = @transform_3, window_bounds = array<i64: 16, 128>}]} {
    %c0 = arith.constant 0 : index
    %0 = memref.load %arg2[%c0] : memref<1xf32, #tpu.memory_space<smem>>
    %1 = math.absf %0 : f32
    %c0_0 = arith.constant 0 : index
    %2 = memref.load %arg3[%c0_0] : memref<1xf32, #tpu.memory_space<smem>>
    %c0_1 = arith.constant 0 : index
    %c0_2 = arith.constant 0 : index
    %3 = vector.load %arg4[%c0_1, %c0_2] : memref<16x128xf32, #tpu.memory_space<vmem>>, vector<16x128xf32>
    %4 = vector.broadcast %1 : f32 to vector<16x128xf32>
    %5 = arith.mulf %4, %3 : vector<16x128xf32>
    %6 = vector.broadcast %2 : f32 to vector<16x128xf32>
    %7 = arith.addf %5, %6 : vector<16x128xf32>
    %c0_3 = arith.constant 0 : index
    %c0_4 = arith.constant 0 : index
    %8 = vector.load %arg5[%c0_3, %c0_4] : memref<16x128xf32, #tpu.memory_space<vmem>>, vector<16x128xf32>
    tpu.vector_store %arg5[%c0_3, %c0_4], %7 {strides = array<i32>} : memref<16x128xf32, #tpu.memory_space<vmem>>, vector<16x128xf32>,
    return
  }
  func.func @transform_0(%arg0: i32, %arg1: i32) -> i32 {
    %c0_i32 = arith.constant 0 : i32
    %c0_i32_0 = arith.constant 0 : i32
    return %c0_i32 : i32
  }
  func.func @transform_1(%arg0: i32, %arg1: i32) -> i32 {
    %c0_i32 = arith.constant 0 : i32
    %c0_i32_0 = arith.constant 0 : i32
    return %c0_i32 : i32
  }
  func.func @transform_2(%arg0: i32, %arg1: i32) -> (i32, i32) {
    %c0_i32 = arith.constant 0 : i32
    return %arg0, %arg1 : i32, i32
  }
  func.func @transform_3(%arg0: i32, %arg1: i32) -> (i32, i32) {
    %c0_i32 = arith.constant 0 : i32
    return %arg0, %arg1 : i32, i32
  }
}

</mosaic_0001>

<llo_original>
// kernel: tpu_custom_call.1
$region0: #{tpu_custom_call.1}
  #allocation0 [shape = 'u32[]', space=smem, size = 0x4, offset = 0x4, fixed_abs, tag = 'smem constant byte address 0x4 - core index']
  #allocation1 [shape = 'u32[144,128]{1,0:T(1,128)}', space=vmem, size = 0x12000, scoped, tag = 'internal scratch']
  #allocation2 [shape = 'f32[1]{0:T(128)S(6)}', space=smem, size = 0x200, scoped, tag = 'scoped memory for tpu_custom_call.1']
  #allocation3 [shape = 'f32[1]{0:T(128)S(6)}', space=smem, size = 0x200, scoped, tag = 'scoped memory for tpu_custom_call.1']
  %s0 = inlined_call_operand.<no memory space> [shape: f32[1], index: 0, kind: input, shape index: {}]
  %s1 = inlined_call_operand.<no memory space> [shape: f32[1], index: 1, kind: input, shape index: {}]
  %s2 = inlined_call_operand.hbm [shape: f32[16,128], index: 2, kind: input, shape index: {}]
  %s3 = inlined_call_operand.hbm [shape: f32[16,128], index: 3, kind: output, shape index: {}]
  %s4 = sld [smem:[#allocation0]]
  $region26: #{tpu_custom_call.1} parent=0
    _
  %s6 = ssub.s32 1, %s4
  %s7 = scalar_select 0, %s6, %s4
  %8 = sst [smem:[#allocation2]] %s0
  %9 = sst [smem:[#allocation3]] %s1
  $region1: #{tpu_custom_call.1} parent=0
    #allocation4 [shape = 'u8[8192]{0}', space=vmem, size = 0x2000, scoped, tag = 'input window, operand 2, single buffered']
    #allocation5 [shape = 's32[1]{0}', space=sflag, size = 0x4, scoped, tag = 'scoped memory for tpu_custom_call.1']
    #allocation6 [shape = 's32[1]{0}', space=sflag, size = 0x4, scoped, tag = 'scoped memory for tpu_custom_call.1']
    #allocation7 [shape = 'u8[8192]{0}', space=vmem, size = 0x2000, scoped, tag = 'output window, operand 0, single buffered']
    %10 = vsyncpa [#allocation5], 0
    %11 = vsyncpa [#allocation6], 0
    // Predicated region
    $region2: #{tpu_custom_call.1} parent=1 // pred_check
      _
    $region3: #{tpu_custom_call.1} parent=1 // pred_check_branch
      %13 = sbr.rel (0) target = $region5
    $region4: #{tpu_custom_call.1} parent=1 // pred_region
      _
    $region5: #{tpu_custom_call.1} parent=1 // pred_fallthru
      _
    // Predicated region
    $region6: #{tpu_custom_call.1} parent=1 // pred_check
      _
    $region7: #{tpu_custom_call.1} parent=1 // pred_check_branch
      %15 = sbr.rel (0) target = $region9
    $region8: #{tpu_custom_call.1} parent=1 // pred_region
      _
    $region9: #{tpu_custom_call.1} parent=1 // pred_fallthru
      _
    // Predicated region
    $region10: #{tpu_custom_call.1} parent=1 // pred_check
      _
    $region11: #{tpu_custom_call.1} parent=1 // pred_check_branch
      %17 = sbr.rel (0) target = $region13
    $region12: #{tpu_custom_call.1} parent=1 // pred_region
      %s19 = ssub.s32 256, 256
      %20 = vsyncadd [#allocation5], %s19
      %s21 = sshll.u32 [#allocation4], 4
      %s22 = int_to_ptr.vmem [resolvable:$true] %s21
      %27 = dma.hbm_to_vmem [thread:$0]  %s2, 256, %s22, [#allocation5], 128, 128, 8
    $region13: #{tpu_custom_call.1} parent=1 // pred_fallthru
      _
    // Predicated region
    $region14: #{tpu_custom_call.1} parent=1 // pred_check
      _
    $region15: #{tpu_custom_call.1} parent=1 // pred_check_branch
      %29 = sbr.rel (0) target = $region17
    $region16: #{tpu_custom_call.1} parent=1 // pred_region
      %30 = dma.done [#allocation5], 256
    $region17: #{tpu_custom_call.1} parent=1 // pred_fallthru
      _
    %s31 = sld [smem:[#allocation2]]
    %s32 = sand.u32 2147483647, %s31
    %s33 = sld [smem:[#allocation3]]
    %v34 = vld [vmem:[#allocation4] sm:$0xff]
    %v35 = vld [vmem:[#allocation4 + $0x8] sm:$0xff]
    %v36 = vstv %s32
    %v37 = vmul.f32 %v36, %v34
    %v38 = vmul.f32 %v36, %v35
    %v39 = vstv %s33
    %v40 = vadd.f32 %v37, %v39
    %v41 = vadd.f32 %v38, %v39
    %42 = vst [vmem:[#allocation7] sm:$0xff] %v40
    %43 = vst [vmem:[#allocation7 + $0x8] sm:$0xff] %v41
    // Predicated region
    $region18: #{tpu_custom_call.1} parent=1 // pred_check
      _
    $region19: #{tpu_custom_call.1} parent=1 // pred_check_branch
      %45 = sbr.rel (0) target = $region21
    $region20: #{tpu_custom_call.1} parent=1 // pred_region
      %s47 = ssub.s32 256, 256
      %48 = vsyncadd [#allocation6], %s47
      %s49 = sshll.u32 [#allocation7], 4
      %s50 = int_to_ptr.vmem [resolvable:$true] %s49
      %55 = dma.vmem_to_hbm [thread:$0]  %s50, 256, %s3, [#allocation6], 128, 128, 8
    $region21: #{tpu_custom_call.1} parent=1 // pred_fallthru
      _
    // Predicated region
    $region22: #{tpu_custom_call.1} parent=1 // pred_check
      _
    $region23: #{tpu_custom_call.1} parent=1 // pred_check_branch
      %57 = sbr.rel (0) target = $region25
    $region24: #{tpu_custom_call.1} parent=1 // pred_region
      %58 = dma.done [#allocation6], 256
    $region25: #{tpu_custom_call.1} parent=1 // pred_fallthru
      _
    %59 = vsyncpa [#allocation5], 1
    %60 = vsyncpa [#allocation6], 1

</llo_original>
